<compile_context>
chip_gen: v6e
topology: v6e:2x2x1
jax: 0.10.0
libtpu: 0.0.40
codegen_flags: <defaults>
</compile_context>

<pallas_src>
import functools

import jax
import jax.numpy as jnp
from jax.experimental import pallas as pl
from jax.experimental.pallas import tpu as pltpu

LANE = 128
_NEG_PAD = -1e30  # bias value for padded output columns: exp() underflows to 0


def _round_up(x, m):
    return ((x + m - 1) // m) * m


# ---------------------------------------------------------------------------
# Fused Pallas kernel
# ---------------------------------------------------------------------------
def _fused_mlp_kernel(*refs, num_hidden, use_bf16):
    """Fused MLP: (linear+ReLU) x num_hidden -> linear -> log_softmax.

    refs = (x_ref, w0, b0, ..., w_{H-1}, b_{H-1}, w_out, b_out, o_ref)

    Intermediate activations are kept as plain jnp values (vregs); only the final
    lane-dense (tile_b, 128) log-softmax block is written to the output ref.
    """
    x_ref = refs[0]
    o_ref = refs[-1]
    p = refs[1:-1]

    def mxu(a, w_ref):
        w = w_ref[...]
        if use_bf16:
            # bf16 MXU inputs (v6e/v7x native path), f32 accumulate.
            a = a.astype(jnp.bfloat16)
            if w.dtype != jnp.bfloat16:
                w = w.astype(jnp.bfloat16)
        return jnp.dot(a, w, preferred_element_type=jnp.float32)

    h = x_ref[...].astype(jnp.float32)
    for layer in range(num_hidden):
        h = jnp.maximum(mxu(h, p[2 * layer]) + p[2 * layer + 1][...], 0.0)
        # TODO(synk): nn.Dropout(0.2) is identity in eval mode; training-mode
        # stochastic masking (pltpu.prng_*) intentionally not applied here.

    # Output layer + numerically-stable log_softmax (all elementwise math in f32).
    # Padded output columns carry a -1e30 bias, so they contribute exactly 0 to
    # the softmax sum and never win the max.
    logits = mxu(h, p[-2]) + p[-1][...]
    m = jnp.max(logits, axis=-1, keepdims=True)
    shifted = logits - m
    lse = jnp.log(jnp.sum(jnp.exp(shifted), axis=-1, keepdims=True))
    o_ref[...] = (shifted - lse).astype(o_ref.dtype)


# ---------------------------------------------------------------------------
# Parameter init (mimics nn.Linear's uniform(-1/sqrt(fan_in), 1/sqrt(fan_in)))
# ---------------------------------------------------------------------------
def init_classifier_params(key, input_size, output_size, hidden_layer_sizes):
    assert hidden_layer_sizes, "This module requires at least one hidden layer"
    sizes = [input_size] + list(hidden_layer_sizes)
    params = {"hidden": [], "out": None}
    for fan_in, fan_out in zip(sizes[:-1], sizes[1:]):
        key, kw, kb = jax.random.split(key, 3)
        bound = 1.0 / float(fan_in) ** 0.5
        w = jax.random.uniform(kw, (fan_in, fan_out), jnp.float32, -bound, bound)
        b = jax.random.uniform(kb, (fan_out,), jnp.float32, -bound, bound)
        params["hidden"].append((w, b))
    fan_in = hidden_layer_sizes[-1]
    key, kw, kb = jax.random.split(key, 3)
    bound = 1.0 / float(fan_in) ** 0.5
    params["out"] = (
        jax.random.uniform(kw, (fan_in, output_size), jnp.float32, -bound, bound),
        jax.random.uniform(kb, (output_size,), jnp.float32, -bound, bound),
    )
    return params


def pack_params(params, *, weights_bf16=False):
    """One-time packing (do NOT call per forward):
       * biases stored as (1, O) so they broadcast in-kernel without reshapes,
       * final layer lane-padded to a multiple of 128 (zero weights, -1e30 bias)
         so the kernel's output store is lane-dense / unmasked,
       * optionally store weight matrices in bf16 (halves HBM weight traffic for
         the bf16 MXU path); biases stay f32.
    Returns (packed_params_pytree, real_output_size)."""
    wdt = jnp.bfloat16 if weights_bf16 else jnp.float32
    hidden = [(w.astype(wdt), b.reshape(1, -1)) for w, b in params["hidden"]]
    w_out, b_out = params["out"]
    fan_in, out_size = w_out.shape
    out_padded = _round_up(out_size, LANE)
    w_pad = jnp.zeros((fan_in, out_padded), jnp.float32).at[:, :out_size].set(w_out)
    b_pad = jnp.full((1, out_padded), _NEG_PAD, jnp.float32).at[0, :out_size].set(b_out)
    return {"hidden": hidden, "out": (w_pad.astype(wdt), b_pad)}, out_size


# ---------------------------------------------------------------------------
# Forward wrapper: single fused pallas_call, batch-tiled "parallel" grid
# ---------------------------------------------------------------------------
@functools.partial(jax.jit, static_argnames=("out_size", "use_bf16", "batch_tile"))
def classifier_forward(packed, x, *, out_size, use_bf16=False, batch_tile=512):
    B, F = x.shape

    # Batch tiling: large batches use batch_tile-row tiles split across cores
    # ("parallel"); small batches run as a single tile rounded up to a sublane
    # multiple of 8.
    tile_b = batch_tile if B >= batch_tile else _round_up(B, 8)
    B_pad = _round_up(B, tile_b)
    if B_pad != B:
        x = jnp.pad(x, ((0, B_pad - B), (0, 0)))

    layers = list(packed["hidden"]) + [packed["out"]]
    flat_params = []
    in_specs = [pl.BlockSpec((tile_b, F), lambda i: (i, 0))]  # x: tiled over batch
    for w, b in layers:
        flat_params += [w, b]
        # Whole-array blocks with a constant index_map -> resident across all
        # grid steps (no re-DMA of weights per batch tile).
        in_specs.append(pl.BlockSpec(w.shape, lambda i: (0, 0)))
        in_specs.append(pl.BlockSpec(b.shape, lambda i: (0, 0)))

    out_padded = packed["out"][0].shape[1]  # lane-padded class dim (multiple of 128)
    kernel = functools.partial(
        _fused_mlp_kernel, num_hidden=len(packed["hidden"]), use_bf16=use_bf16
    )

    out = pl.pallas_call(
        kernel,
        out_shape=jax.ShapeDtypeStruct((B_pad, out_padded), x.dtype),
        grid=(B_pad // tile_b,),
        in_specs=in_specs,
        out_specs=pl.BlockSpec((tile_b, out_padded), lambda i: (i, 0)),
        compiler_params=pltpu.CompilerParams(dimension_semantics=("parallel",)),
    )(x, *flat_params)

    # Slice away batch padding and the lane padding of the class axis.
    return out[:B, :out_size]


# ---------------------------------------------------------------------------
# Reference (pure JAX) for sanity checking
# ---------------------------------------------------------------------------
def classifier_forward_ref(params, x):
    for w, b in params["hidden"]:
        x = jnp.maximum(x @ w + b, 0.0)
    w, b = params["out"]
    return jax.nn.log_softmax(x @ w + b, axis=1)


if __name__ == "__main__":
    key = jax.random.PRNGKey(0)
    key, kx, kp = jax.random.split(key, 3)

    batch, input_size, output_size = 8, 32, 10
    hidden_layer_sizes = [64, 48]

    params = init_classifier_params(kp, input_size, output_size, hidden_layer_sizes)
    packed, out_size = pack_params(params)

    x = jax.random.normal(kx, (batch, input_size), jnp.float32)

    # f32 MXU path — must match the pure-JAX reference tightly.
    out = classifier_forward(packed, x, out_size=out_size, use_bf16=False)
    out = jax.block_until_ready(out)
    ref = classifier_forward_ref(params, x)
    assert out.shape == (batch, output_size)
    assert jnp.allclose(out, ref, atol=1e-5, rtol=1e-5), "f32 path mismatch vs reference"
    assert jnp.allclose(jnp.exp(out).sum(axis=1), 1.0, atol=1e-5)

    # Larger batch exercises the batch-tiled parallel grid and the padding path.
    big_b = 300
    xb = jax.random.normal(kx, (big_b, input_size), jnp.float32)
    out_b = jax.block_until_ready(
        classifier_forward(packed, xb, out_size=out_size, use_bf16=False, batch_tile=128)
    )
    ref_b = classifier_forward_ref(params, xb)
    assert out_b.shape == (big_b, output_size)
    assert jnp.allclose(out_b, ref_b, atol=1e-5, rtol=1e-5), "tiled path mismatch"

    # bf16 MXU path with bf16-packed weights (f32 accumulate + f32 softmax) — loose tol.
    packed_bf16, _ = pack_params(params, weights_bf16=True)
    out_bf16 = jax.block_until_ready(
        classifier_forward(packed_bf16, x, out_size=out_size, use_bf16=True)
    )
    assert out_bf16.shape == (batch, output_size)
    assert bool(jnp.all(jnp.isfinite(out_bf16)))
    assert jnp.allclose(jnp.exp(out_bf16).sum(axis=1), 1.0, atol=1e-3)
    assert float(jnp.max(jnp.abs(out_bf16 - ref))) < 0.1, "bf16 path drifted too far"

    print("KERNEL_OK")
</pallas_src>

<mosaic_0001>
module attributes {stable_mosaic.version = 11 : i64} {
  func.func @_fused_mlp_kernel(%arg0: i32, %arg1: memref<8x32xf32, #tpu.memory_space<vmem>>, %arg2: memref<32x64xf32, #tpu.memory_space<vmem>>, %arg3: memref<1x64xf32, #tpu.memory_space<vmem>>, %arg4: memref<64x48xf32, #tpu.memory_space<vmem>>, %arg5: memref<1x48xf32, #tpu.memory_space<vmem>>, %arg6: memref<48x128xf32, #tpu.memory_space<vmem>>, %arg7: memref<1x128xf32, #tpu.memory_space<vmem>>, %arg8: memref<8x128xf32, #tpu.memory_space<vmem>>) attributes {dimension_semantics = [#tpu.dimension_semantics<parallel>], iteration_bounds = array<i64: 1>, scalar_prefetch = 0 : i64, scratch_operands = 0 : i64, tpu.core_type = #tpu.core_type<tc>, window_params = [{transform_indices = @transform_0, window_bounds = array<i64: 8, 32>}, {pipeline_mode = #tpu.pipeline_mode<synchronous>, transform_indices = @transform_1, window_bounds = array<i64: 32, 64>}, {pipeline_mode = #tpu.pipeline_mode<synchronous>, transform_indices = @transform_2, window_bounds = array<i64: 1, 64>}, {pipeline_mode = #tpu.pipeline_mode<synchronous>, transform_indices = @transform_3, window_bounds = array<i64: 64, 48>}, {pipeline_mode = #tpu.pipeline_mode<synchronous>, transform_indices = @transform_4, window_bounds = array<i64: 1, 48>}, {pipeline_mode = #tpu.pipeline_mode<synchronous>, transform_indices = @transform_5, window_bounds = array<i64: 48, 128>}, {pipeline_mode = #tpu.pipeline_mode<synchronous>, transform_indices = @transform_6, window_bounds = array<i64: 1, 128>}, {transform_indices = @transform_7, window_bounds = array<i64: 8, 128>}]} {
    %c0 = arith.constant 0 : index
    %c0_0 = arith.constant 0 : index
    %0 = vector.load %arg1[%c0, %c0_0] : memref<8x32xf32, #tpu.memory_space<vmem>>, vector<8x32xf32>
    %c0_1 = arith.constant 0 : index
    %c0_2 = arith.constant 0 : index
    %1 = vector.load %arg2[%c0_1, %c0_2] : memref<32x64xf32, #tpu.memory_space<vmem>>, vector<32x64xf32>
    %cst = arith.constant dense<0.000000e+00> : vector<8x64xf32>
    %2 = tpu.matmul %0, %1, %cst {dimension_numbers = #tpu.dot_dimension_numbers<[1], [0], [0], [1], [0, 0, 1, 1], [], []>} : vector<8x32xf32>, vector<32x64xf32>, vector<8x64xf32> -> vector<8x64xf32>
    %c0_3 = arith.constant 0 : index
    %c0_4 = arith.constant 0 : index
    %3 = vector.load %arg3[%c0_3, %c0_4] : memref<1x64xf32, #tpu.memory_space<vmem>>, vector<1x64xf32>
    %4 = vector.broadcast %3 : vector<1x64xf32> to vector<8x64xf32>
    %5 = arith.addf %2, %4 : vector<8x64xf32>
    %cst_5 = arith.constant 0.000000e+00 : f32
    %6 = vector.broadcast %cst_5 : f32 to vector<8x64xf32>
    %7 = arith.maximumf %5, %6 : vector<8x64xf32>
    %c0_6 = arith.constant 0 : index
    %c0_7 = arith.constant 0 : index
    %8 = vector.load %arg4[%c0_6, %c0_7] : memref<64x48xf32, #tpu.memory_space<vmem>>, vector<64x48xf32>
    %cst_8 = arith.constant dense<0.000000e+00> : vector<8x48xf32>
    %9 = tpu.matmul %7, %8, %cst_8 {dimension_numbers = #tpu.dot_dimension_numbers<[1], [0], [0], [1], [0, 0, 1, 1], [], []>} : vector<8x64xf32>, vector<64x48xf32>, vector<8x48xf32> -> vector<8x48xf32>
    %c0_9 = arith.constant 0 : index
    %c0_10 = arith.constant 0 : index
    %10 = vector.load %arg5[%c0_9, %c0_10] : memref<1x48xf32, #tpu.memory_space<vmem>>, vector<1x48xf32>
    %11 = vector.broadcast %10 : vector<1x48xf32> to vector<8x48xf32>
    %12 = arith.addf %9, %11 : vector<8x48xf32>
    %cst_11 = arith.constant 0.000000e+00 : f32
    %13 = vector.broadcast %cst_11 : f32 to vector<8x48xf32>
    %14 = arith.maximumf %12, %13 : vector<8x48xf32>
    %c0_12 = arith.constant 0 : index
    %c0_13 = arith.constant 0 : index
    %15 = vector.load %arg6[%c0_12, %c0_13] : memref<48x128xf32, #tpu.memory_space<vmem>>, vector<48x128xf32>
    %cst_14 = arith.constant dense<0.000000e+00> : vector<8x128xf32>
    %16 = tpu.matmul %14, %15, %cst_14 {dimension_numbers = #tpu.dot_dimension_numbers<[1], [0], [0], [1], [0, 0, 1, 1], [], []>} : vector<8x48xf32>, vector<48x128xf32>, vector<8x128xf32> -> vector<8x128xf32>
    %c0_15 = arith.constant 0 : index
    %c0_16 = arith.constant 0 : index
    %17 = vector.load %arg7[%c0_15, %c0_16] : memref<1x128xf32, #tpu.memory_space<vmem>>, vector<1x128xf32>
    %18 = vector.broadcast %17 : vector<1x128xf32> to vector<8x128xf32>
    %19 = arith.addf %16, %18 : vector<8x128xf32>
    %cst_17 = arith.constant dense<0xFF800000> : vector<8xf32>
    %20 = vector.multi_reduction <maximumf>, %19, %cst_17 [1] : vector<8x128xf32> to vector<8xf32>
    %21 = vector.shape_cast %20 : vector<8xf32> to vector<8x1xf32>
    %22 = vector.broadcast %21 : vector<8x1xf32> to vector<8x128xf32>
    %23 = arith.subf %19, %22 : vector<8x128xf32>
    %24 = math.exp %23 : vector<8x128xf32>
    %cst_18 = arith.constant dense<0.000000e+00> : vector<8xf32>
    %25 = vector.multi_reduction <add>, %24, %cst_18 [1] : vector<8x128xf32> to vector<8xf32>
    %26 = vector.shape_cast %25 : vector<8xf32> to vector<8x1xf32>
    %27 = math.log %26 : vector<8x1xf32>
    %28 = vector.broadcast %27 : vector<8x1xf32> to vector<8x128xf32>
    %29 = arith.subf %23, %28 : vector<8x128xf32>
    %c0_19 = arith.constant 0 : index
    %c0_20 = arith.constant 0 : index
    %30 = vector.load %arg8[%c0_19, %c0_20] : memref<8x128xf32, #tpu.memory_space<vmem>>, vector<8x128xf32>
    tpu.vector_store %arg8[%c0_19, %c0_20], %29 {strides = array<i32>} : memref<8x128xf32, #tpu.memory_space<vmem>>, vector<8x128xf32>,
    return
  }
  func.func @transform_0(%arg0: i32) -> (i32, i32) {
    %c0_i32 = arith.constant 0 : i32
    %c0_i32_0 = arith.constant 0 : i32
    return %arg0, %c0_i32 : i32, i32
  }
  func.func @transform_1(%arg0: i32) -> (i32, i32) {
    %c0_i32 = arith.constant 0 : i32
    %c0_i32_0 = arith.constant 0 : i32
    %c0_i32_1 = arith.constant 0 : i32
    return %c0_i32, %c0_i32_0 : i32, i32
  }
  func.func @transform_2(%arg0: i32) -> (i32, i32) {
    %c0_i32 = arith.constant 0 : i32
    %c0_i32_0 = arith.constant 0 : i32
    %c0_i32_1 = arith.constant 0 : i32
    return %c0_i32, %c0_i32_0 : i32, i32
  }
  func.func @transform_3(%arg0: i32) -> (i32, i32) {
    %c0_i32 = arith.constant 0 : i32
    %c0_i32_0 = arith.constant 0 : i32
    %c0_i32_1 = arith.constant 0 : i32
    return %c0_i32, %c0_i32_0 : i32, i32
  }
  func.func @transform_4(%arg0: i32) -> (i32, i32) {
    %c0_i32 = arith.constant 0 : i32
    %c0_i32_0 = arith.constant 0 : i32
    %c0_i32_1 = arith.constant 0 : i32
    return %c0_i32, %c0_i32_0 : i32, i32
  }
  func.func @transform_5(%arg0: i32) -> (i32, i32) {
    %c0_i32 = arith.constant 0 : i32
    %c0_i32_0 = arith.constant 0 : i32
    %c0_i32_1 = arith.constant 0 : i32
    return %c0_i32, %c0_i32_0 : i32, i32
  }
  func.func @transform_6(%arg0: i32) -> (i32, i32) {
    %c0_i32 = arith.constant 0 : i32
    %c0_i32_0 = arith.constant 0 : i32
    %c0_i32_1 = arith.constant 0 : i32
    return %c0_i32, %c0_i32_0 : i32, i32
  }
  func.func @transform_7(%arg0: i32) -> (i32, i32) {
    %c0_i32 = arith.constant 0 : i32
    %c0_i32_0 = arith.constant 0 : i32
    return %arg0, %c0_i32 : i32, i32
  }
}

</mosaic_0001>

<llo_original>
// kernel: classifier_forward.1
$region0: #{classifier_forward.1}
  #allocation0 [shape = 'u32[]', space=smem, size = 0x4, offset = 0x4, fixed_abs, tag = 'smem constant byte address 0x4 - core index']
  #allocation1 [shape = 'u32[144,128]{1,0:T(1,128)}', space=vmem, size = 0x12000, scoped, tag = 'internal scratch']
  %s0 = inlined_call_operand.vmem [shape: f32[8,32], index: 0, kind: input, shape index: {}]
  %s1 = inlined_call_operand.vmem [shape: f32[32,64], index: 1, kind: input, shape index: {}]
  %s2 = inlined_call_operand.vmem [shape: f32[1,64], index: 2, kind: input, shape index: {}]
  %s3 = inlined_call_operand.vmem [shape: f32[64,48], index: 3, kind: input, shape index: {}]
  %s4 = inlined_call_operand.vmem [shape: f32[1,48], index: 4, kind: input, shape index: {}]
  %s5 = inlined_call_operand.vmem [shape: f32[48,128], index: 5, kind: input, shape index: {}]
  %s6 = inlined_call_operand.vmem [shape: f32[1,128], index: 6, kind: input, shape index: {}]
  %s7 = inlined_call_operand.hbm [shape: f32[8,128], index: 7, kind: output, shape index: {}]
  %s8 = sld [smem:[#allocation0]]
  $region38: #{classifier_forward.1} parent=0
    _
  %s10 = ssub.s32 1, %s8
  %s11 = scalar_select 0, %s10, %s8
  $region1: #{classifier_forward.1} parent=0
    #allocation2 [shape = 'u8[4096]{0}', space=vmem, size = 0x1000, scoped, tag = 'output window, operand 0, single buffered']
    #allocation3 [shape = 's32[1]{0}', space=sflag, size = 0x4, scoped, tag = 'scoped memory for classifier_forward.1']
    %12 = vsyncpa [#allocation3], 0
    // Predicated region
    $region2: #{classifier_forward.1} parent=1 // pred_check
      _
    $region3: #{classifier_forward.1} parent=1 // pred_check_branch
      %14 = sbr.rel (0) target = $region5
    $region4: #{classifier_forward.1} parent=1 // pred_region
      _
    $region5: #{classifier_forward.1} parent=1 // pred_fallthru
      _
    // Predicated region
    $region6: #{classifier_forward.1} parent=1 // pred_check
      _
    $region7: #{classifier_forward.1} parent=1 // pred_check_branch
      %16 = sbr.rel (0) target = $region9
    $region8: #{classifier_forward.1} parent=1 // pred_region
      _
    $region9: #{classifier_forward.1} parent=1 // pred_fallthru
      _
    // Predicated region
    $region10: #{classifier_forward.1} parent=1 // pred_check
      _
    $region11: #{classifier_forward.1} parent=1 // pred_check_branch
      %18 = sbr.rel (0) target = $region13
    $region12: #{classifier_forward.1} parent=1 // pred_region
      _
    $region13: #{classifier_forward.1} parent=1 // pred_fallthru
      _
    // Predicated region
    $region14: #{classifier_forward.1} parent=1 // pred_check
      _
    $region15: #{classifier_forward.1} parent=1 // pred_check_branch
      %20 = sbr.rel (0) target = $region17
    $region16: #{classifier_forward.1} parent=1 // pred_region
      _
    $region17: #{classifier_forward.1} parent=1 // pred_fallthru
      _
    // Predicated region
    $region18: #{classifier_forward.1} parent=1 // pred_check
      _
    $region19: #{classifier_forward.1} parent=1 // pred_check_branch
      %22 = sbr.rel (0) target = $region21
    $region20: #{classifier_forward.1} parent=1 // pred_region
      _
    $region21: #{classifier_forward.1} parent=1 // pred_fallthru
      _
    // Predicated region
    $region22: #{classifier_forward.1} parent=1 // pred_check
      _
    $region23: #{classifier_forward.1} parent=1 // pred_check_branch
      %24 = sbr.rel (0) target = $region25
    $region24: #{classifier_forward.1} parent=1 // pred_region
      _
    $region25: #{classifier_forward.1} parent=1 // pred_fallthru
      _
    // Predicated region
    $region26: #{classifier_forward.1} parent=1 // pred_check
      _
    $region27: #{classifier_forward.1} parent=1 // pred_check_branch
      %26 = sbr.rel (0) target = $region29
    $region28: #{classifier_forward.1} parent=1 // pred_region
      _
    $region29: #{classifier_forward.1} parent=1 // pred_fallthru
      _
    %v27 = vld [vmem:[%s0] sm:$0xff]
    %v28 = vld [vmem:[%s1] sm:$0xff]
    %v29 = vld [vmem:[%s1 + $0x8] sm:$0xff]
    %v30 = vld [vmem:[%s1 + $0x10] sm:$0xff]
    %v31 = vld [vmem:[%s1 + $0x18] sm:$0xff]
    %v32 = vld [vmem:[%s2] sm:$0x1]
    %v34 = vlaneseq
    %v35 = vshrl.u32 %v34, 7
    %v36 = vsub.s32 0, %v35
    %v37 = vrot.slane %v32, %v36
    %vm39 = vcmask 261120
    %v41 = vsel %vm39, %v27, 0
    %43 = vmatprep.subr.mxu0 0.0
    %44 = vmatpush1.msra.mxu0 0.0
    %45 = vmatprep.subr.mxu0 0.0
    %46 = vmatpush1.msra.mxu0 0.0
    %47 = vmatprep.subr.mxu0 0.0
    %48 = vmatpush1.msra.mxu0 0.0
    %49 = vmatprep.subr.mxu0 0.0
    %50 = vmatpush1.msra.mxu0 0.0
    %51 = vmatprep.subr.mxu0 0.0
    %52 = vmatpush1.msra.mxu0 0.0
    %53 = vmatprep.subr.mxu0 0.0
    %54 = vmatpush1.msra.mxu0 0.0
    %55 = vmatprep.subr.mxu0 0.0
    %56 = vmatpush1.msra.mxu0 0.0
    %57 = vmatprep.subr.mxu0 0.0
    %58 = vmatpush1.msra.mxu0 0.0
    %59 = vmatprep.subr.mxu0 0.0
    %60 = vmatpush1.msra.mxu0 0.0
    %61 = vmatprep.subr.mxu0 0.0
    %62 = vmatpush1.msra.mxu0 0.0
    %63 = vmatprep.subr.mxu0 0.0
    %64 = vmatpush1.msra.mxu0 0.0
    %65 = vmatprep.subr.mxu0 0.0
    %66 = vmatpush1.msra.mxu0 0.0
    %67 = vmatprep.subr.mxu0 0.0
    %68 = vmatpush1.msra.mxu0 %v31
    %69 = vmatprep.subr.mxu0 0.0
    %70 = vmatpush1.msra.mxu0 %v30
    %71 = vmatprep.subr.mxu0 0.0
    %72 = vmatpush1.msra.mxu0 %v29
    %73 = vmatprep.subr.mxu0 0.0
    %74 = vmatpush1.msra.mxu0 %v28
    %75 = vmatprep.subr.mxu0 0.0
    %76 = vmatpush2.msra.mxu0 0.0
    %77 = vmatprep.subr.mxu0 0.0
    %78 = vmatpush2.msra.mxu0 0.0
    %79 = vmatprep.subr.mxu0 0.0
    %80 = vmatpush2.msra.mxu0 0.0
    %81 = vmatprep.subr.mxu0 0.0
    %82 = vmatpush2.msra.mxu0 0.0
    %83 = vmatprep.subr.mxu0 0.0
    %84 = vmatpush2.msra.mxu0 0.0
    %85 = vmatprep.subr.mxu0 0.0
    %86 = vmatpush2.msra.mxu0 0.0
    %87 = vmatprep.subr.mxu0 0.0
    %88 = vmatpush2.msra.mxu0 0.0
    %89 = vmatprep.subr.mxu0 0.0
    %90 = vmatpush2.msra.mxu0 0.0
    %91 = vmatprep.subr.mxu0 0.0
    %92 = vmatpush2.msra.mxu0 0.0
    %93 = vmatprep.subr.mxu0 0.0
    %94 = vmatpush2.msra.mxu0 0.0
    %95 = vmatprep.subr.mxu0 0.0
    %96 = vmatpush2.msra.mxu0 0.0
    %97 = vmatprep.subr.mxu0 0.0
    %98 = vmatpush2.msra.mxu0 0.0
    %99 = vmatprep.subr.mxu0 0.0
    %100 = vmatpush2.msra.mxu0 0.0
    %101 = vmatprep.subr.mxu0 0.0
    %102 = vmatpush2.msra.mxu0 0.0
    %103 = vmatprep.subr.mxu0 0.0
    %104 = vmatpush2.msra.mxu0 0.0
    %105 = vmatprep.subr.mxu0 0.0
    %106 = vmatpush2.msra.mxu0 0.0
    %107 = vmatprep.mubr.f32.mxu0 0.0
    %108 = vmatmul.mubr.f32.gmra.mxu0 %v41
    %v109 = vpop.f32.mrf.mxu0
    %v110 = vadd.f32 %v37, %v109
    %v111 = vpop.f32.mrf.mxu0
    %112 = vdwg.mxu0
    %v113 = vmax.f32 %v110, 0.0
    %v114 = vld [vmem:[%s3] sm:$0xff]
    %v115 = vld [vmem:[%s3 + $0x8] sm:$0xff]
    %v116 = vld [vmem:[%s3 + $0x10] sm:$0xff]
    %v117 = vld [vmem:[%s3 + $0x18] sm:$0xff]
    %v118 = vld [vmem:[%s3 + $0x20] sm:$0xff]
    %v119 = vld [vmem:[%s3 + $0x28] sm:$0xff]
    %v120 = vld [vmem:[%s3 + $0x30] sm:$0xff]
    %v121 = vld [vmem:[%s3 + $0x38] sm:$0xff]
    %v122 = vld [vmem:[%s4] sm:$0x1]
    %v124 = vlaneseq
    %v125 = vshrl.u32 %v124, 7
    %v126 = vsub.s32 0, %v125
    %v127 = vrot.slane %v122, %v126
    %vm129 = vcmask 523264
    %v131 = vsel %vm129, %v113, 0
    %133 = vmatprep.subr.mxu0 0.0
    %134 = vmatpush1.msra.mxu0 0.0
    %135 = vmatprep.subr.mxu0 0.0
    %136 = vmatpush1.msra.mxu0 0.0
    %137 = vmatprep.subr.mxu0 0.0
    %138 = vmatpush1.msra.mxu0 0.0
    %139 = vmatprep.subr.mxu0 0.0
    %140 = vmatpush1.msra.mxu0 0.0
    %141 = vmatprep.subr.mxu0 0.0
    %142 = vmatpush1.msra.mxu0 0.0
    %143 = vmatprep.subr.mxu0 0.0
    %144 = vmatpush1.msra.mxu0 0.0
    %145 = vmatprep.subr.mxu0 0.0
    %146 = vmatpush1.msra.mxu0 0.0
    %147 = vmatprep.subr.mxu0 0.0
    %148 = vmatpush1.msra.mxu0 0.0
    %149 = vmatprep.subr.mxu0 0.0
    %150 = vmatpush1.msra.mxu0 %v121
    %151 = vmatprep.subr.mxu0 0.0
    %152 = vmatpush1.msra.mxu0 %v120
    %153 = vmatprep.subr.mxu0 0.0
    %154 = vmatpush1.msra.mxu0 %v119
    %155 = vmatprep.subr.mxu0 0.0
    %156 = vmatpush1.msra.mxu0 %v118
    %157 = vmatprep.subr.mxu0 0.0
    %158 = vmatpush1.msra.mxu0 %v117
    %159 = vmatprep.subr.mxu0 0.0
    %160 = vmatpush1.msra.mxu0 %v116
    %161 = vmatprep.subr.mxu0 0.0
    %162 = vmatpush1.msra.mxu0 %v115
    %163 = vmatprep.subr.mxu0 0.0
    %164 = vmatpush1.msra.mxu0 %v114
    %165 = vmatprep.subr.mxu0 0.0
    %166 = vmatpush2.msra.mxu0 0.0
    %167 = vmatprep.subr.mxu0 0.0
    %168 = vmatpush2.msra.mxu0 0.0
    %169 = vmatprep.subr.mxu0 0.0
    %170 = vmatpush2.msra.mxu0 0.0
    %171 = vmatprep.subr.mxu0 0.0
    %172 = vmatpush2.msra.mxu0 0.0
    %173 = vmatprep.subr.mxu0 0.0
    %174 = vmatpush2.msra.mxu0 0.0
    %175 = vmatprep.subr.mxu0 0.0
    %176 = vmatpush2.msra.mxu0 0.0
    %177 = vmatprep.subr.mxu0 0.0
    %178 = vmatpush2.msra.mxu0 0.0
    %179 = vmatprep.subr.mxu0 0.0
    %180 = vmatpush2.msra.mxu0 0.0
    %181 = vmatprep.subr.mxu0 0.0
    %182 = vmatpush2.msra.mxu0 0.0
    %183 = vmatprep.subr.mxu0 0.0
    %184 = vmatpush2.msra.mxu0 0.0
    %185 = vmatprep.subr.mxu0 0.0
    %186 = vmatpush2.msra.mxu0 0.0
    %187 = vmatprep.subr.mxu0 0.0
    %188 = vmatpush2.msra.mxu0 0.0
    %189 = vmatprep.subr.mxu0 0.0
    %190 = vmatpush2.msra.mxu0 0.0
    %191 = vmatprep.subr.mxu0 0.0
    %192 = vmatpush2.msra.mxu0 0.0
    %193 = vmatprep.subr.mxu0 0.0
    %194 = vmatpush2.msra.mxu0 0.0
    %195 = vmatprep.subr.mxu0 0.0
    %196 = vmatpush2.msra.mxu0 0.0
    %197 = vmatprep.mubr.f32.mxu0 0.0
    %198 = vmatmul.mubr.f32.gmra.mxu0 %v131
    %v199 = vpop.f32.mrf.mxu0
    %v200 = vadd.f32 %v127, %v199
    %v201 = vpop.f32.mrf.mxu0
    %202 = vdwg.mxu0
    %v203 = vmax.f32 %v200, 0.0
    %v204 = vld [vmem:[%s5] sm:$0xff]
    %v205 = vld [vmem:[%s5 + $0x8] sm:$0xff]
    %v206 = vld [vmem:[%s5 + $0x10] sm:$0xff]
    %v207 = vld [vmem:[%s5 + $0x18] sm:$0xff]
    %v208 = vld [vmem:[%s5 + $0x20] sm:$0xff]
    %v209 = vld [vmem:[%s5 + $0x28] sm:$0xff]
    %v210 = vld [vmem:[%s6] sm:$0x1]
    %v212 = vlaneseq
    %v213 = vshrl.u32 %v212, 7
    %v214 = vsub.s32 0, %v213
    %v215 = vrot.slane %v210, %v214
    %vm217 = vcmask 392192
    %v219 = vsel %vm217, %v203, 0
    %221 = vmatprep.subr.mxu0 0.0
    %222 = vmatpush1.msra.mxu0 0.0
    %223 = vmatprep.subr.mxu0 0.0
    %224 = vmatpush1.msra.mxu0 0.0
    %225 = vmatprep.subr.mxu0 0.0
    %226 = vmatpush1.msra.mxu0 0.0
    %227 = vmatprep.subr.mxu0 0.0
    %228 = vmatpush1.msra.mxu0 0.0
    %229 = vmatprep.subr.mxu0 0.0
    %230 = vmatpush1.msra.mxu0 0.0
    %231 = vmatprep.subr.mxu0 0.0
    %232 = vmatpush1.msra.mxu0 0.0
    %233 = vmatprep.subr.mxu0 0.0
    %234 = vmatpush1.msra.mxu0 0.0
    %235 = vmatprep.subr.mxu0 0.0
    %236 = vmatpush1.msra.mxu0 0.0
    %237 = vmatprep.subr.mxu0 0.0
    %238 = vmatpush1.msra.mxu0 0.0
    %239 = vmatprep.subr.mxu0 0.0
    %240 = vmatpush1.msra.mxu0 0.0
    %241 = vmatprep.subr.mxu0 0.0
    %242 = vmatpush1.msra.mxu0 %v209
    %243 = vmatprep.subr.mxu0 0.0
    %244 = vmatpush1.msra.mxu0 %v208
    %245 = vmatprep.subr.mxu0 0.0
    %246 = vmatpush1.msra.mxu0 %v207
    %247 = vmatprep.subr.mxu0 0.0
    %248 = vmatpush1.msra.mxu0 %v206
    %249 = vmatprep.subr.mxu0 0.0
    %250 = vmatpush1.msra.mxu0 %v205
    %251 = vmatprep.subr.mxu0 0.0
    %252 = vmatpush1.msra.mxu0 %v204
    %253 = vmatprep.subr.mxu0 0.0
    %254 = vmatpush2.msra.mxu0 0.0
    %255 = vmatprep.subr.mxu0 0.0
    %256 = vmatpush2.msra.mxu0 0.0
    %257 = vmatprep.subr.mxu0 0.0
    %258 = vmatpush2.msra.mxu0 0.0
    %259 = vmatprep.subr.mxu0 0.0
    %260 = vmatpush2.msra.mxu0 0.0
    %261 = vmatprep.subr.mxu0 0.0
    %262 = vmatpush2.msra.mxu0 0.0
    %263 = vmatprep.subr.mxu0 0.0
    %264 = vmatpush2.msra.mxu0 0.0
    %265 = vmatprep.subr.mxu0 0.0
    %266 = vmatpush2.msra.mxu0 0.0
    %267 = vmatprep.subr.mxu0 0.0
    %268 = vmatpush2.msra.mxu0 0.0
    %269 = vmatprep.subr.mxu0 0.0
    %270 = vmatpush2.msra.mxu0 0.0
    %271 = vmatprep.subr.mxu0 0.0
    %272 = vmatpush2.msra.mxu0 0.0
    %273 = vmatprep.subr.mxu0 0.0
    %274 = vmatpush2.msra.mxu0 0.0
    %275 = vmatprep.subr.mxu0 0.0
    %276 = vmatpush2.msra.mxu0 0.0
    %277 = vmatprep.subr.mxu0 0.0
    %278 = vmatpush2.msra.mxu0 0.0
    %279 = vmatprep.subr.mxu0 0.0
    %280 = vmatpush2.msra.mxu0 0.0
    %281 = vmatprep.subr.mxu0 0.0
    %282 = vmatpush2.msra.mxu0 0.0
    %283 = vmatprep.subr.mxu0 0.0
    %284 = vmatpush2.msra.mxu0 0.0
    %285 = vmatprep.mubr.f32.mxu0 0.0
    %286 = vmatmul.mubr.f32.gmra.mxu0 %v219
    %v287 = vpop.f32.mrf.mxu0
    %v288 = vadd.f32 %v215, %v287
    %v289 = vpop.f32.mrf.mxu0
    %290 = vdwg.mxu0
    %291 = vmax.xlane.f32.xlu0 %v288
    %v292 = vpop.xlane.xlu0 %291
    %v293 = vsub.f32 %v288, %v292
    %v294 = vmul.f32 %v293, 1.442695
    %v295 = vpow.pop %v294
    %296 = vadd.xlane.f32.xlu0 %v295
    %v297 = vpop.xlane.xlu0 %296
    %v298 = vlog2.pop %v297
    %v299 = vmul.f32 %v298, 0.6931472
    %v300 = vsub.f32 %v293, %v299
    %301 = vst [vmem:[#allocation2] sm:$0xff] %v300
    // Predicated region
    $region30: #{classifier_forward.1} parent=1 // pred_check
      _
    $region31: #{classifier_forward.1} parent=1 // pred_check_branch
      %303 = sbr.rel (0) target = $region33
    $region32: #{classifier_forward.1} parent=1 // pred_region
      %s305 = ssub.s32 128, 128
      %306 = vsyncadd [#allocation3], %s305
      %s308 = sshll.u32 [#allocation2], 4
      %s309 = int_to_ptr.vmem [resolvable:$true] %s308
      %311 = dma.vmem_to_hbm [thread:$0]  %s309, 128, %s7, [#allocation3]
    $region33: #{classifier_forward.1} parent=1 // pred_fallthru
      _
    // Predicated region
    $region34: #{classifier_forward.1} parent=1 // pred_check
      _
    $region35: #{classifier_forward.1} parent=1 // pred_check_branch
      %313 = sbr.rel (0) target = $region37
    $region36: #{classifier_forward.1} parent=1 // pred_region
      %314 = dma.done [#allocation3], 128
    $region37: #{classifier_forward.1} parent=1 // pred_fallthru
      _
    %315 = vsyncpa [#allocation3], 1

</llo_original>
